<compile_context>
chip_gen: v7x
topology: tpu7x:2x2x1
jax: 0.10.0
libtpu: 0.0.40
codegen_flags: <defaults>
</compile_context>

<pallas_src>
import functools

import jax
import jax.numpy as jnp
from jax.experimental import pallas as pl
from jax.experimental.pallas import tpu as pltpu


# -----------------------------------------------------------------------------
# Fused kernel: InstanceNorm1d -> Linear+ReLU -> Linear+Sigmoid
#   x_ref : (S, TR)   rows along lanes, segment along sublanes
#   w1_ref: (E, S)    torch mlp1.weight layout
#   b1_ref: (E, 1)
#   w2_ref: (E, 1)    torch mlp2.weight transposed
#   b2_ref: (1, 1)    SMEM scalar
#   o_ref : (1, TR)   lane-dense output
# -----------------------------------------------------------------------------
def _suppress_kernel(x_ref, w1_ref, b1_ref, w2_ref, b2_ref, o_ref, *, eps):
    x = x_ref[...].astype(jnp.float32)                        # (S, TR)

    # InstanceNorm1d (affine=False): per-column mean / biased var over S
    mean = jnp.mean(x, axis=0, keepdims=True)                  # (1, TR)
    xc = x - mean
    var = jnp.mean(xc * xc, axis=0, keepdims=True)             # (1, TR)
    xn = xc * jax.lax.rsqrt(var + jnp.float32(eps))            # (S, TR)

    # mlp1 + ReLU: (E, S) @ (S, TR) -> (E, TR), MXU N = TR (lane-dense)
    h = jnp.dot(w1_ref[...], xn, preferred_element_type=jnp.float32)
    h = jnp.maximum(h + b1_ref[...], 0.0)                      # (E, TR)

    # mlp2 (out width 1) as multiply + sublane reduce, then sigmoid
    z = jnp.sum(h * w2_ref[...], axis=0, keepdims=True) + b2_ref[0, 0]  # (1, TR)
    o_ref[...] = jax.nn.sigmoid(z).astype(o_ref.dtype)


# -----------------------------------------------------------------------------
# Wrapper
# -----------------------------------------------------------------------------
def suppress_net_forward(inputs, w1, b1, w2, b2, *, eps=1e-5):
    """inputs: (B, S, n_class); w1: (E, S); b1: (E, 1); w2: (E, 1); b2: (1, 1).

    w1 is torch mlp1.weight as-is (shape (E, S)); w2 is torch mlp2.weight
    transposed (shape (E, 1)).
    """
    B, S, C = inputs.shape
    E = w1.shape[0]
    R = B * C
    LANE = 128

    # (B, S, C) -> (S, B, C) -> (S, R): column index r = b*C + c, rows in lanes.
    cols = jnp.transpose(inputs, (1, 0, 2)).reshape(S, R)

    # Row-tile selection:
    #  - small R: single full-extent block (block dim == array dim, no padding)
    #  - large R: >=2 grid steps (v7x megacore), TR multiple of 128, cap 4096
    if R <= 256:
        TR = R
        Rp = R
    else:
        half = pl.cdiv(R, 2)
        TR = min(4096, pl.cdiv(half, LANE) * LANE)
        Rp = pl.cdiv(R, TR) * TR
    if Rp != R:
        cols = jnp.pad(cols, ((0, 0), (0, Rp - R)))
    grid = (Rp // TR,)

    out = pl.pallas_call(
        functools.partial(_suppress_kernel, eps=eps),
        out_shape=jax.ShapeDtypeStruct((1, Rp), inputs.dtype),
        grid=grid,
        in_specs=[
            pl.BlockSpec((S, TR), lambda i: (0, i)),     # streamed per row tile
            pl.BlockSpec((E, S), lambda i: (0, 0)),      # weights: VMEM-resident
            pl.BlockSpec((E, 1), lambda i: (0, 0)),
            pl.BlockSpec((E, 1), lambda i: (0, 0)),
            pl.BlockSpec(memory_space=pltpu.MemorySpace.SMEM),  # b2 scalar
        ],
        out_specs=pl.BlockSpec((1, TR), lambda i: (0, i)),      # lane-dense out
        compiler_params=pltpu.CompilerParams(
            dimension_semantics=("parallel",)),
    )(cols, w1, b1, w2, b2)

    return out[0, :R].reshape(B, C)


# -----------------------------------------------------------------------------
# Pure-JAX reference (matches the PyTorch forward)
# -----------------------------------------------------------------------------
def suppress_net_ref(inputs, w1, b1, w2, b2, eps=1e-5):
    base = jnp.transpose(inputs, (0, 2, 1))                    # (B, C, S)
    mean = base.mean(-1, keepdims=True)
    var = ((base - mean) ** 2).mean(-1, keepdims=True)         # biased var
    xn = (base - mean) / jnp.sqrt(var + eps)
    h = jnp.maximum(jnp.einsum("bcs,es->bce", xn, w1) + b1[:, 0], 0.0)
    z = jnp.einsum("bce,e->bc", h, w2[:, 0]) + b2[0, 0]
    return jax.nn.sigmoid(z)                                   # (B, C)


# -----------------------------------------------------------------------------
# Main
# -----------------------------------------------------------------------------
if __name__ == "__main__":
    # opt = {'num_of_class': 21, 'segment_size': 16}
    num_of_class, segment_size = 21, 16
    n_class = num_of_class - 1          # 20
    S = segment_size                    # 16
    E = 2 * S                           # 32
    B = 2

    key = jax.random.PRNGKey(0)
    kx, k1, k2, k3, k4 = jax.random.split(key, 5)
    x = jax.random.normal(kx, (B, S, n_class), dtype=jnp.float32)

    # Deterministic nn.Linear-style parameters (torch layouts: mlp1.weight (E,S),
    # mlp2.weight (1,E) -> transposed to (E,1) here).
    bound1 = 1.0 / (S ** 0.5)
    w1 = jax.random.uniform(k1, (E, S), jnp.float32, -bound1, bound1)
    b1 = jax.random.uniform(k2, (E, 1), jnp.float32, -bound1, bound1)
    bound2 = 1.0 / (E ** 0.5)
    w2 = jax.random.uniform(k3, (E, 1), jnp.float32, -bound2, bound2)
    b2 = jax.random.uniform(k4, (1, 1), jnp.float32, -bound2, bound2)

    out = suppress_net_forward(x, w1, b1, w2, b2)
    out = jax.block_until_ready(out)

    ref = suppress_net_ref(x, w1, b1, w2, b2)
    assert out.shape == (B, n_class)
    assert jnp.allclose(out, ref, atol=1e-5, rtol=1e-5)

    print("KERNEL_OK")
</pallas_src>

<mosaic_0001>
module attributes {stable_mosaic.version = 11 : i64} {
  func.func @_suppress_kernel(%arg0: i32, %arg1: memref<16x40xf32, #tpu.memory_space<vmem>>, %arg2: memref<32x16xf32, #tpu.memory_space<vmem>>, %arg3: memref<32x1xf32, #tpu.memory_space<vmem>>, %arg4: memref<32x1xf32, #tpu.memory_space<vmem>>, %arg5: memref<1x1xf32, #tpu.memory_space<smem>>, %arg6: memref<1x40xf32, #tpu.memory_space<vmem>>) attributes {dimension_semantics = [#tpu.dimension_semantics<parallel>], iteration_bounds = array<i64: 1>, scalar_prefetch = 0 : i64, scratch_operands = 0 : i64, tpu.core_type = #tpu.core_type<tc>, window_params = [{transform_indices = @transform_0, window_bounds = array<i64: 16, 40>}, {pipeline_mode = #tpu.pipeline_mode<synchronous>, transform_indices = @transform_1, window_bounds = array<i64: 32, 16>}, {pipeline_mode = #tpu.pipeline_mode<synchronous>, transform_indices = @transform_2, window_bounds = array<i64: 32, 1>}, {pipeline_mode = #tpu.pipeline_mode<synchronous>, transform_indices = @transform_3, window_bounds = array<i64: 32, 1>}, {transform_indices = @transform_4, window_bounds = array<i64: 1, 1>}, {transform_indices = @transform_5, window_bounds = array<i64: 1, 40>}]} {
    %c0 = arith.constant 0 : index
    %c0_0 = arith.constant 0 : index
    %0 = vector.load %arg1[%c0, %c0_0] : memref<16x40xf32, #tpu.memory_space<vmem>>, vector<16x40xf32>
    %cst = arith.constant dense<0.000000e+00> : vector<40xf32>
    %1 = vector.multi_reduction <add>, %0, %cst [0] : vector<16x40xf32> to vector<40xf32>
    %2 = vector.shape_cast %1 : vector<40xf32> to vector<1x40xf32>
    %cst_1 = arith.constant 1.600000e+01 : f32
    %3 = vector.broadcast %cst_1 : f32 to vector<1x40xf32>
    %4 = arith.divf %2, %3 : vector<1x40xf32>
    %5 = vector.broadcast %4 : vector<1x40xf32> to vector<16x40xf32>
    %6 = arith.subf %0, %5 : vector<16x40xf32>
    %7 = arith.mulf %6, %6 : vector<16x40xf32>
    %cst_2 = arith.constant dense<0.000000e+00> : vector<40xf32>
    %8 = vector.multi_reduction <add>, %7, %cst_2 [0] : vector<16x40xf32> to vector<40xf32>
    %9 = vector.shape_cast %8 : vector<40xf32> to vector<1x40xf32>
    %cst_3 = arith.constant 1.600000e+01 : f32
    %10 = vector.broadcast %cst_3 : f32 to vector<1x40xf32>
    %11 = arith.divf %9, %10 : vector<1x40xf32>
    %cst_4 = arith.constant 9.99999974E-6 : f32
    %12 = vector.broadcast %cst_4 : f32 to vector<1x40xf32>
    %13 = arith.addf %11, %12 : vector<1x40xf32>
    %14 = math.rsqrt %13 : vector<1x40xf32>
    %15 = vector.broadcast %14 : vector<1x40xf32> to vector<16x40xf32>
    %16 = arith.mulf %6, %15 : vector<16x40xf32>
    %c0_5 = arith.constant 0 : index
    %c0_6 = arith.constant 0 : index
    %17 = vector.load %arg2[%c0_5, %c0_6] : memref<32x16xf32, #tpu.memory_space<vmem>>, vector<32x16xf32>
    %cst_7 = arith.constant dense<0.000000e+00> : vector<32x40xf32>
    %18 = tpu.matmul %17, %16, %cst_7 {dimension_numbers = #tpu.dot_dimension_numbers<[1], [0], [0], [1], [0, 0, 1, 1], [], []>} : vector<32x16xf32>, vector<16x40xf32>, vector<32x40xf32> -> vector<32x40xf32>
    %c0_8 = arith.constant 0 : index
    %c0_9 = arith.constant 0 : index
    %19 = vector.load %arg3[%c0_8, %c0_9] : memref<32x1xf32, #tpu.memory_space<vmem>>, vector<32x1xf32>
    %20 = vector.broadcast %19 : vector<32x1xf32> to vector<32x40xf32>
    %21 = arith.addf %18, %20 : vector<32x40xf32>
    %cst_10 = arith.constant 0.000000e+00 : f32
    %22 = vector.broadcast %cst_10 : f32 to vector<32x40xf32>
    %23 = arith.maximumf %21, %22 : vector<32x40xf32>
    %c0_11 = arith.constant 0 : index
    %c0_12 = arith.constant 0 : index
    %24 = vector.load %arg4[%c0_11, %c0_12] : memref<32x1xf32, #tpu.memory_space<vmem>>, vector<32x1xf32>
    %25 = vector.broadcast %24 : vector<32x1xf32> to vector<32x40xf32>
    %26 = arith.mulf %23, %25 : vector<32x40xf32>
    %cst_13 = arith.constant dense<0.000000e+00> : vector<40xf32>
    %27 = vector.multi_reduction <add>, %26, %cst_13 [0] : vector<32x40xf32> to vector<40xf32>
    %28 = vector.shape_cast %27 : vector<40xf32> to vector<1x40xf32>
    %c0_14 = arith.constant 0 : index
    %c0_15 = arith.constant 0 : index
    %29 = memref.load %arg5[%c0_14, %c0_15] : memref<1x1xf32, #tpu.memory_space<smem>>
    %30 = vector.broadcast %29 : f32 to vector<1x40xf32>
    %31 = arith.addf %28, %30 : vector<1x40xf32>
    %32 = arith.negf %31 : vector<1x40xf32>
    %33 = math.exp %32 : vector<1x40xf32>
    %cst_16 = arith.constant 1.000000e+00 : f32
    %34 = vector.broadcast %cst_16 : f32 to vector<1x40xf32>
    %35 = arith.addf %34, %33 : vector<1x40xf32>
    %36 = arith.divf %34, %35 : vector<1x40xf32>
    %c0_17 = arith.constant 0 : index
    %c0_18 = arith.constant 0 : index
    %37 = vector.load %arg6[%c0_17, %c0_18] : memref<1x40xf32, #tpu.memory_space<vmem>>, vector<1x40xf32>
    tpu.vector_store %arg6[%c0_17, %c0_18], %36 {strides = array<i32>} : memref<1x40xf32, #tpu.memory_space<vmem>>, vector<1x40xf32>,
    return
  }
  func.func @transform_0(%arg0: i32) -> (i32, i32) {
    %c0_i32 = arith.constant 0 : i32
    %c0_i32_0 = arith.constant 0 : i32
    return %c0_i32, %arg0 : i32, i32
  }
  func.func @transform_1(%arg0: i32) -> (i32, i32) {
    %c0_i32 = arith.constant 0 : i32
    %c0_i32_0 = arith.constant 0 : i32
    %c0_i32_1 = arith.constant 0 : i32
    return %c0_i32, %c0_i32_0 : i32, i32
  }
  func.func @transform_2(%arg0: i32) -> (i32, i32) {
    %c0_i32 = arith.constant 0 : i32
    %c0_i32_0 = arith.constant 0 : i32
    %c0_i32_1 = arith.constant 0 : i32
    return %c0_i32, %c0_i32_0 : i32, i32
  }
  func.func @transform_3(%arg0: i32) -> (i32, i32) {
    %c0_i32 = arith.constant 0 : i32
    %c0_i32_0 = arith.constant 0 : i32
    %c0_i32_1 = arith.constant 0 : i32
    return %c0_i32, %c0_i32_0 : i32, i32
  }
  func.func @transform_4(%arg0: i32) -> (i32, i32) {
    %c0_i32 = arith.constant 0 : i32
    %c0_i32_0 = arith.constant 0 : i32
    %c0_i32_1 = arith.constant 0 : i32
    return %c0_i32, %c0_i32_0 : i32, i32
  }
  func.func @transform_5(%arg0: i32) -> (i32, i32) {
    %c0_i32 = arith.constant 0 : i32
    %c0_i32_0 = arith.constant 0 : i32
    return %c0_i32, %arg0 : i32, i32
  }
}

</mosaic_0001>

<llo_original>
// kernel: tpu_custom_call.1
$region0: #{tpu_custom_call.1}
  #allocation0 [shape = 'u32[]', space=smem, size = 0x4, offset = 0x4, fixed_abs, tag = 'smem constant byte address 0x4 - core index']
  #allocation1 [shape = 'u32[144,128]{1,0:T(1,128)}', space=vmem, size = 0x12000, scoped, tag = 'internal scratch']
  #allocation2 [shape = 'f32[1,1]{1,0:T(1,128)S(6)}', space=smem, size = 0x200, scoped, tag = 'scoped memory for tpu_custom_call.1']
  %s0 = inlined_call_operand.vmem [shape: f32[16,40], index: 0, kind: input, shape index: {}]
  %s1 = inlined_call_operand.vmem [shape: f32[32,16], index: 1, kind: input, shape index: {}]
  %s2 = inlined_call_operand.vmem [shape: f32[32,1], index: 2, kind: input, shape index: {}]
  %s3 = inlined_call_operand.vmem [shape: f32[32,1], index: 3, kind: input, shape index: {}]
  %s4 = inlined_call_operand.<no memory space> [shape: f32[1,1], index: 4, kind: input, shape index: {}]
  %s5 = inlined_call_operand.hbm [shape: f32[1,40], index: 5, kind: output, shape index: {}]
  %s6 = sld [smem:[#allocation0]]
  $region30: #{tpu_custom_call.1} parent=0
    _
  %s8 = ssub.s32 1, %s6
  %s9 = scalar_select 0, %s8, %s6
  %10 = sst [smem:[#allocation2]] %s4
  $region1: #{tpu_custom_call.1} parent=0
    #allocation3 [shape = 'u8[512]{0}', space=vmem, size = 0x400, scoped, tag = 'output window, operand 0, single buffered']
    #allocation4 [shape = 's32[1]{0}', space=sflag, size = 0x4, scoped, tag = 'scoped memory for tpu_custom_call.1']
    %11 = vsyncpa [#allocation4], 0
    // Predicated region
    $region2: #{tpu_custom_call.1} parent=1 // pred_check
      _
    $region3: #{tpu_custom_call.1} parent=1 // pred_check_branch
      %13 = sbr.rel (0) target = $region5
    $region4: #{tpu_custom_call.1} parent=1 // pred_region
      _
    $region5: #{tpu_custom_call.1} parent=1 // pred_fallthru
      _
    // Predicated region
    $region6: #{tpu_custom_call.1} parent=1 // pred_check
      _
    $region7: #{tpu_custom_call.1} parent=1 // pred_check_branch
      %15 = sbr.rel (0) target = $region9
    $region8: #{tpu_custom_call.1} parent=1 // pred_region
      _
    $region9: #{tpu_custom_call.1} parent=1 // pred_fallthru
      _
    // Predicated region
    $region10: #{tpu_custom_call.1} parent=1 // pred_check
      _
    $region11: #{tpu_custom_call.1} parent=1 // pred_check_branch
      %17 = sbr.rel (0) target = $region13
    $region12: #{tpu_custom_call.1} parent=1 // pred_region
      _
    $region13: #{tpu_custom_call.1} parent=1 // pred_fallthru
      _
    // Predicated region
    $region14: #{tpu_custom_call.1} parent=1 // pred_check
      _
    $region15: #{tpu_custom_call.1} parent=1 // pred_check_branch
      %19 = sbr.rel (0) target = $region17
    $region16: #{tpu_custom_call.1} parent=1 // pred_region
      _
    $region17: #{tpu_custom_call.1} parent=1 // pred_fallthru
      _
    // Predicated region
    $region18: #{tpu_custom_call.1} parent=1 // pred_check
      _
    $region19: #{tpu_custom_call.1} parent=1 // pred_check_branch
      %21 = sbr.rel (0) target = $region21
    $region20: #{tpu_custom_call.1} parent=1 // pred_region
      _
    $region21: #{tpu_custom_call.1} parent=1 // pred_fallthru
      _
    %v22 = vld [vmem:[%s0] sm:$0xff]
    %v23 = vld [vmem:[%s0 + $0x8] sm:$0xff]
    %vm24 = vcmask 326656
    %v25 = vsel %vm24, %v22, 0.0
    %v26 = vsel %vm24, %v23, 0.0
    %v27 = vadd.f32 %v25, %v26
    %v28 = vrot.slane %v27, 4
    %v29 = vadd.f32 %v27, %v28
    %v30 = vrot.slane %v29, 2
    %v31 = vadd.f32 %v29, %v30
    %v32 = vrot.slane %v31, 1
    %v33 = vadd.f32 %v31, %v32
    %v34 = vrcp.pop 16.0
    %v35 = vmul.f32 %v33, %v34
    %v36 = vsub.f32 %v22, %v35
    %v37 = vsub.f32 %v23, %v35
    %v38 = vmul.f32 %v36, %v36
    %v39 = vmul.f32 %v37, %v37
    %v40 = vsel %vm24, %v38, 0.0
    %v41 = vsel %vm24, %v39, 0.0
    %v42 = vadd.f32 %v40, %v41
    %v43 = vrot.slane %v42, 4
    %v44 = vadd.f32 %v42, %v43
    %v45 = vrot.slane %v44, 2
    %v46 = vadd.f32 %v44, %v45
    %v47 = vrot.slane %v46, 1
    %v48 = vadd.f32 %v46, %v47
    %v49 = vmul.f32 %v48, %v34
    %v50 = vadd.f32 %v49, 1e-05
    %v51 = vrsqrt.pop %v50
    %v52 = vmul.f32 %v36, %v51
    %v53 = vmul.f32 %v37, %v51
    %v54 = vld [vmem:[%s1] sm:$0xff]
    %v55 = vld [vmem:[%s1 + $0x8] sm:$0xff]
    %v56 = vld [vmem:[%s1 + $0x10] sm:$0xff]
    %v57 = vld [vmem:[%s1 + $0x18] sm:$0xff]
    %v58 = vld [vmem:[%s2] sm:$0xff]
    %v59 = vld [vmem:[%s2 + $0x8] sm:$0xff]
    %v60 = vld [vmem:[%s2 + $0x10] sm:$0xff]
    %v61 = vld [vmem:[%s2 + $0x18] sm:$0xff]
    %63 = vset.pattern.permute.xlu0 0
    %64 = vperm.xlu0 %63, %v58
    %v65 = vpop.permute.xlu0 %64
    %68 = vset.pattern.permute.xlu0 0
    %69 = vperm.xlu0 %68, %v59
    %v70 = vpop.permute.xlu0 %69
    %73 = vset.pattern.permute.xlu0 0
    %74 = vperm.xlu0 %73, %v60
    %v75 = vpop.permute.xlu0 %74
    %78 = vset.pattern.permute.xlu0 0
    %79 = vperm.xlu0 %78, %v61
    %v80 = vpop.permute.xlu0 %79
    %vm82 = vcmask 130048
    %v84 = vsel %vm82, %v54, 0
    %v87 = vsel %vm82, %v55, 0
    %v90 = vsel %vm82, %v56, 0
    %v93 = vsel %vm82, %v57, 0
    %95 = vmatprep.subr.mxu0 0.0
    %96 = vmatpush1.msra.mxu0 %v52
    %97 = vmatprep.subr.mxu0 0.0
    %98 = vmatpush1.msra.mxu0 %v53
    %99 = vmatprep.subr.mxu0 0.0
    %100 = vmatpush1.msra.mxu0 0.0
    %101 = vmatprep.subr.mxu0 0.0
    %102 = vmatpush1.msra.mxu0 0.0
    %103 = vmatprep.subr.mxu0 0.0
    %104 = vmatpush1.msra.mxu0 0.0
    %105 = vmatprep.subr.mxu0 0.0
    %106 = vmatpush1.msra.mxu0 0.0
    %107 = vmatprep.subr.mxu0 0.0
    %108 = vmatpush1.msra.mxu0 0.0
    %109 = vmatprep.subr.mxu0 0.0
    %110 = vmatpush1.msra.mxu0 0.0
    %111 = vmatprep.subr.mxu0 0.0
    %112 = vmatpush1.msra.mxu0 0.0
    %113 = vmatprep.subr.mxu0 0.0
    %114 = vmatpush1.msra.mxu0 0.0
    %115 = vmatprep.subr.mxu0 0.0
    %116 = vmatpush1.msra.mxu0 0.0
    %117 = vmatprep.subr.mxu0 0.0
    %118 = vmatpush1.msra.mxu0 0.0
    %119 = vmatprep.subr.mxu0 0.0
    %120 = vmatpush1.msra.mxu0 0.0
    %121 = vmatprep.subr.mxu0 0.0
    %122 = vmatpush1.msra.mxu0 0.0
    %123 = vmatprep.subr.mxu0 0.0
    %124 = vmatpush1.msra.mxu0 0.0
    %125 = vmatprep.subr.mxu0 0.0
    %126 = vmatpush1.msra.mxu0 0.0
    %127 = vmatprep.subr.mxu0 0.0
    %128 = vmatpush1.msra.mxu0 0.0
    %129 = vmatprep.subr.mxu0 0.0
    %130 = vmatpush1.msra.mxu0 0.0
    %131 = vmatprep.subr.mxu0 0.0
    %132 = vmatpush1.msra.mxu0 0.0
    %133 = vmatprep.subr.mxu0 0.0
    %134 = vmatpush1.msra.mxu0 0.0
    %135 = vmatprep.subr.mxu0 0.0
    %136 = vmatpush1.msra.mxu0 0.0
    %137 = vmatprep.subr.mxu0 0.0
    %138 = vmatpush1.msra.mxu0 0.0
    %139 = vmatprep.subr.mxu0 0.0
    %140 = vmatpush1.msra.mxu0 0.0
    %141 = vmatprep.subr.mxu0 0.0
    %142 = vmatpush1.msra.mxu0 0.0
    %143 = vmatprep.subr.mxu0 0.0
    %144 = vmatpush1.msra.mxu0 0.0
    %145 = vmatprep.subr.mxu0 0.0
    %146 = vmatpush1.msra.mxu0 0.0
    %147 = vmatprep.subr.mxu0 0.0
    %148 = vmatpush1.msra.mxu0 0.0
    %149 = vmatprep.subr.mxu0 0.0
    %150 = vmatpush1.msra.mxu0 0.0
    %151 = vmatprep.subr.mxu0 0.0
    %152 = vmatpush1.msra.mxu0 0.0
    %153 = vmatprep.subr.mxu0 0.0
    %154 = vmatpush1.msra.mxu0 0.0
    %155 = vmatprep.subr.mxu0 0.0
    %156 = vmatpush1.msra.mxu0 0.0
    %157 = vmatprep.subr.mxu0 0.0
    %158 = vmatpush1.msra.mxu0 0.0
    %159 = vmatprep.mubr.f32.mxu0 0.0
    %160 = vmatmul.mubr.f32.gmra.mrb[0].mxu0 %v84
    %v161 = vpop.f32.mrb[0].mxu0
    %v162 = vadd.f32 %v65, %v161
    %v163 = vpop.f32.mrb[0].mxu0
    %164 = vmatprep.mubr.f32.mxu0 0.0
    %165 = vmatmul.mubr.f32.gmra.mrb[0].mxu0 %v87
    %v166 = vpop.f32.mrb[0].mxu0
    %v167 = vadd.f32 %v70, %v166
    %v168 = vpop.f32.mrb[0].mxu0
    %169 = vmatprep.mubr.f32.mxu0 0.0
    %170 = vmatmul.mubr.f32.gmra.mrb[0].mxu0 %v90
    %v171 = vpop.f32.mrb[0].mxu0
    %v172 = vadd.f32 %v75, %v171
    %v173 = vpop.f32.mrb[0].mxu0
    %174 = vmatprep.mubr.f32.mxu0 0.0
    %175 = vmatmul.mubr.f32.gmra.mrb[0].mxu0 %v93
    %v176 = vpop.f32.mrb[0].mxu0
    %v177 = vadd.f32 %v80, %v176
    %v178 = vpop.f32.mrb[0].mxu0
    %179 = vdwg.mxu0
    %v180 = vmax.f32 %v162, 0.0
    %v181 = vmax.f32 %v167, 0.0
    %v182 = vmax.f32 %v172, 0.0
    %v183 = vmax.f32 %v177, 0.0
    %v184 = vld [vmem:[%s3] sm:$0xff]
    %v185 = vld [vmem:[%s3 + $0x8] sm:$0xff]
    %v186 = vld [vmem:[%s3 + $0x10] sm:$0xff]
    %v187 = vld [vmem:[%s3 + $0x18] sm:$0xff]
    %189 = vset.pattern.permute.xlu0 0
    %190 = vperm.xlu0 %189, %v184
    %v191 = vpop.permute.xlu0 %190
    %194 = vset.pattern.permute.xlu0 0
    %195 = vperm.xlu0 %194, %v185
    %v196 = vpop.permute.xlu0 %195
    %199 = vset.pattern.permute.xlu0 0
    %200 = vperm.xlu0 %199, %v186
    %v201 = vpop.permute.xlu0 %200
    %204 = vset.pattern.permute.xlu0 0
    %205 = vperm.xlu0 %204, %v187
    %v206 = vpop.permute.xlu0 %205
    %v208 = vmul.f32 %v180, %v191
    %v209 = vmul.f32 %v181, %v196
    %v210 = vmul.f32 %v182, %v201
    %v211 = vmul.f32 %v183, %v206
    %v212 = vsel %vm24, %v208, 0.0
    %v213 = vsel %vm24, %v209, 0.0
    %v214 = vadd.f32 %v212, %v213
    %v215 = vsel %vm24, %v210, 0.0
    %v216 = vadd.f32 %v214, %v215
    %v217 = vsel %vm24, %v211, 0.0
    %v218 = vadd.f32 %v216, %v217
    %v219 = vrot.slane %v218, 4
    %v220 = vadd.f32 %v218, %v219
    %v221 = vrot.slane %v220, 2
    %v222 = vadd.f32 %v220, %v221
    %v223 = vrot.slane %v222, 1
    %v224 = vadd.f32 %v222, %v223
    %s225 = sld [smem:[#allocation2]]
    %v226 = vstv %s225
    %v227 = vadd.f32 %v224, %v226
    %v228 = vxor.u32 %v227, 2147483648
    %v229 = vmul.f32 %v228, 1.442695
    %v230 = vpow.pop %v229
    %v231 = vadd.f32 %v230, 1.0
    %v232 = vrcp.pop %v231
    %v233 = vmul.f32 1.0, %v232
    %vm234 = vcmask 319488
    %235 = vst.msk [vmem:[#allocation3] sm:$0x1] %vm234, %v233
    // Predicated region
    $region22: #{tpu_custom_call.1} parent=1 // pred_check
      _
    $region23: #{tpu_custom_call.1} parent=1 // pred_check_branch
      %237 = sbr.rel (0) target = $region25
    $region24: #{tpu_custom_call.1} parent=1 // pred_region
      %s239 = ssub.s32 16, 16
      %240 = vsyncadd [#allocation4], %s239
      %s242 = sshll.u32 [#allocation3], 4
      %s243 = int_to_ptr.vmem [resolvable:$true] %s242
      %245 = dma.vmem_to_hbm [thread:$0]  %s243, 16, %s5, [#allocation4]
    $region25: #{tpu_custom_call.1} parent=1 // pred_fallthru
      _
    // Predicated region
    $region26: #{tpu_custom_call.1} parent=1 // pred_check
      _
    $region27: #{tpu_custom_call.1} parent=1 // pred_check_branch
      %247 = sbr.rel (0) target = $region29
    $region28: #{tpu_custom_call.1} parent=1 // pred_region
      %248 = dma.done [#allocation4], 16
    $region29: #{tpu_custom_call.1} parent=1 // pred_fallthru
      _
    %249 = vsyncpa [#allocation4], 1

</llo_original>
